<compile_context>
chip_gen: v7x
topology: tpu7x:2x2x1
jax: 0.10.0
libtpu: 0.0.40
codegen_flags: <defaults>
</compile_context>

<pallas_src>
import itertools

import jax
import jax.numpy as jnp
from jax import lax
from jax.experimental import pallas as pl
from jax.experimental.pallas import tpu as pltpu


def _conv_relu_kernel(x_ref, w_ref, b_ref, o_ref):
    # x_ref : (1, K*Cin, tP) bf16  im2col slab (taps folded into contraction)
    # w_ref : (Cout, K*Cin)  bf16  resident weight matrix
    # b_ref : (Cout, 1)      f32   resident bias column
    # o_ref : (1, Cout, tP)  f32   lane-dense output tile
    acc = jnp.dot(w_ref[...], x_ref[0], preferred_element_type=jnp.float32)
    acc = acc + b_ref[...]
    o_ref[0] = jnp.maximum(acc, 0.0).astype(o_ref.dtype)


def _choose_p_tile(p, cap=2048):
    """Largest lane-multiple tile <= cap dividing p; full extent otherwise."""
    if p % 128 != 0 or p <= cap:
        return p
    t = (cap // 128) * 128
    while t >= 128:
        if p % t == 0:
            return t
        t -= 128
    return p


def conv_block_forward(x, w, b, *, p_tile_cap=2048):
    """ReLU(Conv3d(x, w, b, kernel=3, stride=1, padding=1)).

    x: (N, Cin, D, H, W) f32 (PyTorch NCDHW layout)
    w: (Cout, Cin, 3, 3, 3) f32
    b: (Cout,) f32
    returns: (N, Cout, D, H, W) f32
    """
    N, Cin, D, H, W = x.shape
    Cout = w.shape[0]
    K = 27
    KC = K * Cin
    P = D * H * W

    # --- glue (outside the kernel): pad + im2col with taps folded into the
    #     contraction axis.  Layout (N, K*Cin, P) keeps P in the lane dim and
    #     avoids Cin=4 ever being a lane dimension.
    # TODO(synk): form the 27 shifted windows in-kernel from a padded VMEM
    # slab to avoid materializing the 27x im2col tensor in HBM.
    x_pad = jnp.pad(x, ((0, 0), (0, 0), (1, 1), (1, 1), (1, 1)))
    taps = [
        x_pad[:, :, kd:kd + D, kh:kh + H, kw:kw + W].reshape(N, Cin, P)
        for kd, kh, kw in itertools.product(range(3), repeat=3)
    ]
    patches = jnp.concatenate(taps, axis=1).astype(jnp.bfloat16)     # (N, 108, P)

    # Weight as (Cout, K*Cin): tap-major / Cin-minor rows to match patches.
    w_mat = jnp.transpose(w, (0, 2, 3, 4, 1)).reshape(Cout, KC).astype(jnp.bfloat16)
    b_col = b.reshape(Cout, 1).astype(jnp.float32)

    tP = _choose_p_tile(P, p_tile_cap)
    grid = (N, P // tP)

    out = pl.pallas_call(
        _conv_relu_kernel,
        out_shape=jax.ShapeDtypeStruct((N, Cout, P), jnp.float32),
        grid_spec=pltpu.PrefetchScalarGridSpec(
            num_scalar_prefetch=0,
            grid=grid,
            in_specs=[
                pl.BlockSpec((1, KC, tP), lambda n, p: (n, 0, p)),
                pl.BlockSpec((Cout, KC), lambda n, p: (0, 0)),   # resident
                pl.BlockSpec((Cout, 1), lambda n, p: (0, 0)),    # resident
            ],
            out_specs=pl.BlockSpec((1, Cout, tP), lambda n, p: (n, 0, p)),
        ),
        compiler_params=pltpu.CompilerParams(
            dimension_semantics=("parallel", "parallel")),
    )(patches, w_mat, b_col)

    # (N, Cout, P) is already NCDHW-ordered: just reshape, no transpose.
    return out.reshape(N, Cout, D, H, W)


if __name__ == "__main__":
    key = jax.random.PRNGKey(0)
    k_x, k_w, k_b = jax.random.split(key, 3)

    N, Cin, Cout, D, H, W = 2, 4, 8, 8, 8, 8
    x = jax.random.normal(k_x, (N, Cin, D, H, W), dtype=jnp.float32)

    # Deterministic param init (PyTorch-style uniform(-1/sqrt(fan_in), ...)).
    fan_in = Cin * 3 * 3 * 3
    bound = 1.0 / float(jnp.sqrt(jnp.float32(fan_in)))
    w = jax.random.uniform(k_w, (Cout, Cin, 3, 3, 3),
                           minval=-bound, maxval=bound, dtype=jnp.float32)
    b = jax.random.uniform(k_b, (Cout,),
                           minval=-bound, maxval=bound, dtype=jnp.float32)

    y = jax.block_until_ready(conv_block_forward(x, w, b))
    assert y.shape == (N, Cout, D, H, W)

    def ref(xr, wr):
        o = lax.conv_general_dilated(
            xr, wr, window_strides=(1, 1, 1), padding=[(1, 1)] * 3,
            dimension_numbers=("NCDHW", "OIDHW", "NCDHW"))
        return jnp.maximum(o + b[None, :, None, None, None], 0.0)

    # Tight check against a reference built from the same bf16-rounded
    # operands (isolates indexing/bias/ReLU correctness from bf16 quantization).
    y_ref_bf16 = ref(x.astype(jnp.bfloat16).astype(jnp.float32),
                     w.astype(jnp.bfloat16).astype(jnp.float32))
    assert jnp.allclose(y, y_ref_bf16, atol=1e-3, rtol=1e-3)

    # Loose check against the full-f32 reference (original module semantics;
    # tolerance widened for the bf16 MXU inputs).
    y_ref_f32 = ref(x, w)
    assert jnp.allclose(y, y_ref_f32, atol=3e-2, rtol=3e-2)

    print("KERNEL_OK")
</pallas_src>

<mosaic_0001>
module attributes {stable_mosaic.version = 11 : i64} {
  func.func @_conv_relu_kernel(%arg0: i32, %arg1: i32, %arg2: memref<1x108x512xbf16, #tpu.memory_space<vmem>>, %arg3: memref<8x108xbf16, #tpu.memory_space<vmem>>, %arg4: memref<8x1xf32, #tpu.memory_space<vmem>>, %arg5: memref<1x8x512xf32, #tpu.memory_space<vmem>>) attributes {dimension_semantics = [#tpu.dimension_semantics<parallel>, #tpu.dimension_semantics<parallel>], iteration_bounds = array<i64: 2, 1>, scalar_prefetch = 0 : i64, scratch_operands = 0 : i64, tpu.core_type = #tpu.core_type<tc>, window_params = [{transform_indices = @transform_0, window_bounds = array<i64: 1, 108, 512>}, {pipeline_mode = #tpu.pipeline_mode<synchronous>, transform_indices = @transform_1, window_bounds = array<i64: 8, 108>}, {pipeline_mode = #tpu.pipeline_mode<synchronous>, transform_indices = @transform_2, window_bounds = array<i64: 8, 1>}, {transform_indices = @transform_3, window_bounds = array<i64: 1, 8, 512>}]} {
    %c0 = arith.constant 0 : index
    %c0_0 = arith.constant 0 : index
    %0 = vector.load %arg3[%c0, %c0_0] : memref<8x108xbf16, #tpu.memory_space<vmem>>, vector<8x108xbf16>
    %c0_1 = arith.constant 0 : index
    %c0_2 = arith.constant 0 : index
    %c0_3 = arith.constant 0 : index
    %1 = vector.load %arg2[%c0_1, %c0_2, %c0_3] : memref<1x108x512xbf16, #tpu.memory_space<vmem>>, vector<1x108x512xbf16>
    %2 = vector.shape_cast %1 : vector<1x108x512xbf16> to vector<108x512xbf16>
    %cst = arith.constant dense<0.000000e+00> : vector<8x512xf32>
    %3 = tpu.matmul %0, %2, %cst {dimension_numbers = #tpu.dot_dimension_numbers<[1], [0], [0], [1], [0, 0, 1, 1], [], []>} : vector<8x108xbf16>, vector<108x512xbf16>, vector<8x512xf32> -> vector<8x512xf32>
    %c0_4 = arith.constant 0 : index
    %c0_5 = arith.constant 0 : index
    %4 = vector.load %arg4[%c0_4, %c0_5] : memref<8x1xf32, #tpu.memory_space<vmem>>, vector<8x1xf32>
    %5 = vector.broadcast %4 : vector<8x1xf32> to vector<8x512xf32>
    %6 = arith.addf %3, %5 : vector<8x512xf32>
    %cst_6 = arith.constant 0.000000e+00 : f32
    %7 = vector.broadcast %cst_6 : f32 to vector<8x512xf32>
    %8 = arith.maximumf %6, %7 : vector<8x512xf32>
    %c0_7 = arith.constant 0 : index
    %c0_8 = arith.constant 0 : index
    %c0_9 = arith.constant 0 : index
    %9 = vector.load %arg5[%c0_7, %c0_8, %c0_9] : memref<1x8x512xf32, #tpu.memory_space<vmem>>, vector<1x8x512xf32>
    %10 = vector.shape_cast %9 : vector<1x8x512xf32> to vector<8x512xf32>
    %11 = vector.shape_cast %8 : vector<8x512xf32> to vector<1x8x512xf32>
    tpu.vector_store %arg5[%c0_7, %c0_8, %c0_9], %11 {strides = array<i32>} : memref<1x8x512xf32, #tpu.memory_space<vmem>>, vector<1x8x512xf32>,
    return
  }
  func.func @transform_0(%arg0: i32, %arg1: i32) -> (i32, i32, i32) {
    %c0_i32 = arith.constant 0 : i32
    %c0_i32_0 = arith.constant 0 : i32
    return %arg0, %c0_i32, %arg1 : i32, i32, i32
  }
  func.func @transform_1(%arg0: i32, %arg1: i32) -> (i32, i32) {
    %c0_i32 = arith.constant 0 : i32
    %c0_i32_0 = arith.constant 0 : i32
    %c0_i32_1 = arith.constant 0 : i32
    return %c0_i32, %c0_i32_0 : i32, i32
  }
  func.func @transform_2(%arg0: i32, %arg1: i32) -> (i32, i32) {
    %c0_i32 = arith.constant 0 : i32
    %c0_i32_0 = arith.constant 0 : i32
    %c0_i32_1 = arith.constant 0 : i32
    return %c0_i32, %c0_i32_0 : i32, i32
  }
  func.func @transform_3(%arg0: i32, %arg1: i32) -> (i32, i32, i32) {
    %c0_i32 = arith.constant 0 : i32
    %c0_i32_0 = arith.constant 0 : i32
    return %arg0, %c0_i32, %arg1 : i32, i32, i32
  }
}

</mosaic_0001>

<llo_original>
// kernel: tpu_custom_call.1
$region0: #{tpu_custom_call.1}
  #allocation0 [shape = 'u32[]', space=smem, size = 0x4, offset = 0x4, fixed_abs, tag = 'smem constant byte address 0x4 - core index']
  #allocation1 [shape = 'u32[144,128]{1,0:T(1,128)}', space=vmem, size = 0x12000, scoped, tag = 'internal scratch']
  %s0 = inlined_call_operand.vmem [shape: bf16[2,108,512], index: 0, kind: input, shape index: {}]
  %s1 = inlined_call_operand.vmem [shape: bf16[8,108], index: 1, kind: input, shape index: {}]
  %s2 = inlined_call_operand.vmem [shape: f32[8,1], index: 2, kind: input, shape index: {}]
  %s3 = inlined_call_operand.hbm [shape: f32[2,8,512], index: 3, kind: output, shape index: {}]
  %s4 = sld [smem:[#allocation0]]
  $region45: #{tpu_custom_call.1} parent=0
    _
  %s6 = ssub.s32 1, %s4
  %s7 = scalar_select 0, %s6, %s4
  $region1: #{tpu_custom_call.1} parent=0
    #allocation2 [shape = 'u8[32768]{0}', space=vmem, size = 0x8000, scoped, tag = 'output window, operand 0']
    #allocation3 [shape = 's32[2]{0}', space=sflag, size = 0x8, scoped, tag = 'scoped memory for tpu_custom_call.1']
    %8 = vsyncpa [#allocation3], 0
    %s9 = scalar_lea.sflag [#allocation3], 1
    %10 = vsyncpa %s9, 0
    loop: start=0, step=1, limit=4
    $region2: #{tpu_custom_call.1} parent=1 // loop_pre_header
      _
    $region3: #{tpu_custom_call.1} parent=1 // loop_header
      %s12 = sphi 0, %s16
      %p13 = scmp.ge.s32.totalorder %s12, 4
      %s19 = sphi 0, %s31
      %s20 = sphi 0, %s27
      %s21 = sphi 0, %s19
      %s22 = sphi 0, %s20
      %s23 = sphi 0, %s21
      %s24 = sphi 0, %s22
      %s36 = sphi 0, %s38
      %s39 = sphi 0, %s36
      %s40 = sphi 0, %s39
      %s56 = sphi 0, %s40
      %s60 = sphi 0, %s60
      %s62 = sphi 0, %s60
      %s63 = sphi 0, %s62
      %s77 = sphi 0, %s63
      %s81 = sphi 0, %s81
      %s83 = sphi 0, %s81
      %s84 = sphi 0, %s83
      %s98 = sphi 0, %s84
      %s106 = sphi 0, %s108
      %s109 = sphi 0, %s106
      %s110 = sphi 0, %s109
      %s126 = sphi 0, %s110
    $region4: #{tpu_custom_call.1} parent=1 // loop_header_branch
      %15 = sbr.rel (%p13) target = $region8
    $region5: #{tpu_custom_call.1} parent=1 // loop_body
      %s17 = ssub.s32 %s12, 1
      %s18 = ssub.s32 %s12, 2
      %s25 = sadd.s32 1, %s20
      %p26 = scmp.ge.s32.totalorder %s25, 1
      %s27 = scalar_select %p26, 0, %s25
      %s28 = sadd.s32 1, %s19
      %s29 = scalar_select %p26, %s28, %s19
      %p30 = scmp.ge.s32.totalorder %s29, 2
      %s31 = scalar_select %p30, 0, %s29
      %s32 = ssub.s32 %s19, %s31
      %s33 = ssub.s32 %s20, %s27
      %s34 = sor.u32 %s32, %s33
      %p35 = scmp.eq.s32.totalorder %s34, 0
      %s37 = sadd.s32 %s36, 1
      %s38 = scalar_select %p35, %s36, %s37
      %p41 = pneg %p35
      %p42 = scmp.eq.s32.totalorder %s12, 1
      %p43 = por %p41, %p42
      %p44 = scmp.ne.s32.totalorder %s36, %s39
      %p45 = scmp.eq.s32.totalorder %s12, 0
      %p46 = por %p44, %p45
      %p47 = scmp.ne.s32.totalorder %s36, %s39
      %p48 = scmp.eq.s32.totalorder %s17, 1
      %p49 = por %p47, %p48
      %p50 = scmp.ne.s32.totalorder %s39, %s40
      %p51 = scmp.eq.s32.totalorder %s17, 0
      %p52 = por %p50, %p51
      %p53 = scmp.ne.s32.totalorder %s39, %s40
      %p54 = scmp.eq.s32.totalorder %s18, 1
      %p55 = por %p53, %p54
      %p57 = scmp.ne.s32.totalorder %s40, %s56
      %p58 = scmp.eq.s32.totalorder %s18, 0
      %p59 = por %p57, %p58
      %s61 = sadd.s32 %s60, 1
      %p64 = scmp.eq.s32.totalorder %s12, 1
      %p65 = scmp.ne.s32.totalorder %s60, %s62
      %p66 = scmp.eq.s32.totalorder %s12, 0
      %p67 = por %p65, %p66
      %p68 = scmp.ne.s32.totalorder %s60, %s62
      %p69 = scmp.eq.s32.totalorder %s17, 1
      %p70 = por %p68, %p69
      %p71 = scmp.ne.s32.totalorder %s62, %s63
      %p72 = scmp.eq.s32.totalorder %s17, 0
      %p73 = por %p71, %p72
      %p74 = scmp.ne.s32.totalorder %s62, %s63
      %p75 = scmp.eq.s32.totalorder %s18, 1
      %p76 = por %p74, %p75
      %p78 = scmp.ne.s32.totalorder %s63, %s77
      %p79 = scmp.eq.s32.totalorder %s18, 0
      %p80 = por %p78, %p79
      %s82 = sadd.s32 %s81, 1
      %p85 = scmp.eq.s32.totalorder %s12, 1
      %p86 = scmp.ne.s32.totalorder %s81, %s83
      %p87 = scmp.eq.s32.totalorder %s12, 0
      %p88 = por %p86, %p87
      %p89 = scmp.ne.s32.totalorder %s81, %s83
      %p90 = scmp.eq.s32.totalorder %s17, 1
      %p91 = por %p89, %p90
      %p92 = scmp.ne.s32.totalorder %s83, %s84
      %p93 = scmp.eq.s32.totalorder %s17, 0
      %p94 = por %p92, %p93
      %p95 = scmp.ne.s32.totalorder %s83, %s84
      %p96 = scmp.eq.s32.totalorder %s18, 1
      %p97 = por %p95, %p96
      %p99 = scmp.ne.s32.totalorder %s84, %s98
      %p100 = scmp.eq.s32.totalorder %s18, 0
      %p101 = por %p99, %p100
      %s102 = ssub.s32 %s19, %s31
      %s103 = ssub.s32 %s20, %s27
      %s104 = sor.u32 %s102, %s103
      %p105 = scmp.eq.s32.totalorder %s104, 0
      %s107 = sadd.s32 %s106, 1
      %s108 = scalar_select %p105, %s106, %s107
      %p111 = pneg %p105
      %p112 = scmp.eq.s32.totalorder %s12, 1
      %p113 = por %p111, %p112
      %p114 = scmp.ne.s32.totalorder %s106, %s109
      %p115 = scmp.eq.s32.totalorder %s12, 0
      %p116 = por %p114, %p115
      %p117 = scmp.ne.s32.totalorder %s106, %s109
      %p118 = scmp.eq.s32.totalorder %s17, 1
      %p119 = por %p117, %p118
      %p120 = scmp.ne.s32.totalorder %s109, %s110
      %p121 = scmp.eq.s32.totalorder %s17, 0
      %p122 = por %p120, %p121
      %p123 = scmp.ne.s32.totalorder %s109, %s110
      %p124 = scmp.eq.s32.totalorder %s18, 1
      %p125 = por %p123, %p124
      %p127 = scmp.ne.s32.totalorder %s110, %s126
      %p128 = scmp.eq.s32.totalorder %s18, 0
      %p129 = por %p127, %p128
      %p130 = scmp.le.s32.totalorder 1, %s12
      %p131 = scmp.lt.s32.totalorder %s12, 3
      %p132 = pnand %p130, %p131
      %p133 = pneg %p132
      // Predicated region
      $region9: #{tpu_custom_call.1} parent=5 // pred_check
        _
      $region10: #{tpu_custom_call.1} parent=5 // pred_check_branch
        %135 = sbr.rel (%p132) target = $region12
      $region11: #{tpu_custom_call.1} parent=5 // pred_region
        %s136 = ssub.s32 %s12, 1
        // Predicated region
        $region13: #{tpu_custom_call.1} parent=11 // pred_check
          %p137 = pneg %p73
        $region14: #{tpu_custom_call.1} parent=11 // pred_check_branch
          %139 = sbr.rel (%p137) target = $region16
        $region15: #{tpu_custom_call.1} parent=11 // pred_region
          _
        $region16: #{tpu_custom_call.1} parent=11 // pred_fallthru
          _
        // Predicated region
        $region17: #{tpu_custom_call.1} parent=11 // pred_check
          %p140 = pneg %p94
        $region18: #{tpu_custom_call.1} parent=11 // pred_check_branch
          %142 = sbr.rel (%p140) target = $region20
        $region19: #{tpu_custom_call.1} parent=11 // pred_region
          _
        $region20: #{tpu_custom_call.1} parent=11 // pred_fallthru
          _
      $region12: #{tpu_custom_call.1} parent=5 // pred_fallthru
        _
      %p143 = scmp.lt.s32.totalorder %s12, 2
      // Predicated region
      $region21: #{tpu_custom_call.1} parent=5 // pred_check
        %p144 = pneg %p143
      $region22: #{tpu_custom_call.1} parent=5 // pred_check_branch
        %146 = sbr.rel (%p144) target = $region24
      $region23: #{tpu_custom_call.1} parent=5 // pred_region
        // Predicated region
        $region25: #{tpu_custom_call.1} parent=23 // pred_check
          %p147 = pneg %p46
        $region26: #{tpu_custom_call.1} parent=23 // pred_check_branch
          %149 = sbr.rel (%p147) target = $region28
        $region27: #{tpu_custom_call.1} parent=23 // pred_region
          %s150 = smul.u32 4, %s20
          %p151 = scmp.lt.s32.totalorder %s19, 1
          %s152 = scalar_select %p151, %s19, 1
          %p153 = scmp.lt.s32.totalorder %s150, 3
          %s154 = scalar_select %p153, %s150, 3
          %s155 = smul.addr %s152, 56
          %s156 = sadd.s32 %s154, %s155
          %s157 = smul.addr %s156, 4
          %s158 = scalar_lea.vmem %s0, %s157
          %s159 = smul.u32 4, %s20
        $region28: #{tpu_custom_call.1} parent=23 // pred_fallthru
          _
      $region24: #{tpu_custom_call.1} parent=5 // pred_fallthru
        _
      %p160 = scmp.le.s32.totalorder 1, %s12
      %p161 = scmp.lt.s32.totalorder %s12, 3
      %p162 = pnand %p160, %p161
      %p163 = pneg %p162
      // Predicated region
      $region29: #{tpu_custom_call.1} parent=5 // pred_check
        _
      $region30: #{tpu_custom_call.1} parent=5 // pred_check_branch
        %165 = sbr.rel (%p162) target = $region32
      $region31: #{tpu_custom_call.1} parent=5 // pred_region
        %s166 = ssub.s32 %s12, 1
        %s167 = smul.u32 4, %s22
        %p168 = scmp.lt.s32.totalorder %s21, 1
        %s169 = scalar_select %p168, %s21, 1
        %p170 = scmp.lt.s32.totalorder %s167, 3
        %s171 = scalar_select %p170, %s167, 3
        %s172 = smul.addr %s169, 56
        %s173 = sadd.s32 %s171, %s172
        %s174 = smul.addr %s173, 4
        %s175 = scalar_lea.vmem %s0, %s174
        %p176 = pneg %p52
        %p177 = pneg %p49
        %p178 = pneg %p73
        %p179 = pneg %p70
        %p180 = pneg %p94
        %p181 = pneg %p91
        %p182 = pneg %p122
        %p183 = pneg %p119
        %s184 = sand.u32 %s109, 1
        %s185 = scalar_lea.sflag [#allocation3], %s184
        %s186 = sand.u32 %s109, 1
        %s187 = smul.addr %s186, 32
        %s188 = scalar_lea.vmem [#allocation2], %s187
        %s189 = smul.u32 4, %s22
        %p190 = scmp.lt.s32.totalorder %s21, 1
        %s191 = scalar_select %p190, %s21, 1
        %p192 = scmp.lt.s32.totalorder %s189, 3
        %s193 = scalar_select %p192, %s189, 3
        %s194 = smul.addr %s191, 56
        %s195 = sadd.s32 %s193, %s194
        %s196 = smul.addr %s195, 4
        %s197 = scalar_lea.vmem %s0, %s196
        %s198 = smul.u32 4, %s22
        %s199 = smul.u32 4, %s22
        %v201 = vld [vmem:[%s1] sm:$0xf]
        %v202 = vld [vmem:[%s197] sm:$0xff]
        %v203 = vld [vmem:[%s197 + $0x8] sm:$0xff]
        %v204 = vld [vmem:[%s197 + $0x10] sm:$0xff]
        %v205 = vld [vmem:[%s197 + $0x18] sm:$0xff]
        %v206 = vld [vmem:[%s197 + $0x20] sm:$0xff]
        %v207 = vld [vmem:[%s197 + $0x28] sm:$0xff]
        %v208 = vld [vmem:[%s197 + $0x30] sm:$0xff]
        %v209 = vld [vmem:[%s197 + $0x38] sm:$0xff]
        %v210 = vld [vmem:[%s197 + $0x40] sm:$0xff]
        %v211 = vld [vmem:[%s197 + $0x48] sm:$0xff]
        %v212 = vld [vmem:[%s197 + $0x50] sm:$0xff]
        %v213 = vld [vmem:[%s197 + $0x58] sm:$0xff]
        %v214 = vld [vmem:[%s197 + $0x60] sm:$0xff]
        %v215 = vld [vmem:[%s197 + $0x68] sm:$0xff]
        %v216 = vld [vmem:[%s197 + $0x70] sm:$0xff]
        %v217 = vld [vmem:[%s197 + $0x78] sm:$0xff]
        %v218 = vld [vmem:[%s197 + $0x80] sm:$0xff]
        %v219 = vld [vmem:[%s197 + $0x88] sm:$0xff]
        %v220 = vld [vmem:[%s197 + $0x90] sm:$0xff]
        %v221 = vld [vmem:[%s197 + $0x98] sm:$0xff]
        %v222 = vld [vmem:[%s197 + $0xa0] sm:$0xff]
        %v223 = vld [vmem:[%s197 + $0xa8] sm:$0xff]
        %v224 = vld [vmem:[%s197 + $0xb0] sm:$0xff]
        %v225 = vld [vmem:[%s197 + $0xb8] sm:$0xff]
        %v226 = vld [vmem:[%s197 + $0xc0] sm:$0xff]
        %v227 = vld [vmem:[%s197 + $0xc8] sm:$0xff]
        %v228 = vld [vmem:[%s197 + $0xd0] sm:$0x33]
        %v229 = vld [vmem:[%s197 + $0xd8] sm:$0x33]
        %v230 = vld [vmem:[%s2] sm:$0xff]
        %232 = vset.pattern.permute.xlu0 0
        %233 = vperm.xlu0 %232, %v230
        %v234 = vpop.permute.xlu0 %233
        %v264 = vunpack.c.l.b16 %v202
        %v265 = vunpack.c.h.b16 %v202
        %v266 = vunpack.c.l.b16 %v203
        %v267 = vunpack.c.h.b16 %v203
        %v268 = vunpack.c.l.b16 %v204
        %v269 = vunpack.c.h.b16 %v204
        %v270 = vunpack.c.l.b16 %v205
        %v271 = vunpack.c.h.b16 %v205
        %v272 = vunpack.c.l.b16 %v206
        %v273 = vunpack.c.h.b16 %v206
        %v274 = vunpack.c.l.b16 %v207
        %v275 = vunpack.c.h.b16 %v207
        %v276 = vunpack.c.l.b16 %v208
        %v277 = vunpack.c.h.b16 %v208
        %v278 = vunpack.c.l.b16 %v209
        %v279 = vunpack.c.h.b16 %v209
        %v280 = vunpack.c.l.b16 %v210
        %v281 = vunpack.c.h.b16 %v210
        %v282 = vunpack.c.l.b16 %v211
        %v283 = vunpack.c.h.b16 %v211
        %v284 = vunpack.c.l.b16 %v212
        %v285 = vunpack.c.h.b16 %v212
        %v286 = vunpack.c.l.b16 %v213
        %v287 = vunpack.c.h.b16 %v213
        %v288 = vunpack.c.l.b16 %v214
        %v289 = vunpack.c.h.b16 %v214
        %v290 = vunpack.c.l.b16 %v215
        %v291 = vunpack.c.h.b16 %v215
        %v292 = vunpack.c.l.b16 %v216
        %v293 = vunpack.c.h.b16 %v216
        %v294 = vunpack.c.l.b16 %v217
        %v295 = vunpack.c.h.b16 %v217
        %v296 = vunpack.c.l.b16 %v218
        %v297 = vunpack.c.h.b16 %v218
        %v298 = vunpack.c.l.b16 %v219
        %v299 = vunpack.c.h.b16 %v219
        %v300 = vunpack.c.l.b16 %v220
        %v301 = vunpack.c.h.b16 %v220
        %v302 = vunpack.c.l.b16 %v221
        %v303 = vunpack.c.h.b16 %v221
        %v304 = vunpack.c.l.b16 %v222
        %v305 = vunpack.c.h.b16 %v222
        %v306 = vunpack.c.l.b16 %v223
        %v307 = vunpack.c.h.b16 %v223
        %v308 = vunpack.c.l.b16 %v224
        %v309 = vunpack.c.h.b16 %v224
        %v310 = vunpack.c.l.b16 %v225
        %v311 = vunpack.c.h.b16 %v225
        %v312 = vunpack.c.l.b16 %v226
        %v313 = vunpack.c.h.b16 %v226
        %v314 = vunpack.c.l.b16 %v227
        %v315 = vunpack.c.h.b16 %v227
        %v316 = vunpack.c.l.b16 %v228
        %v317 = vunpack.c.h.b16 %v228
        %v318 = vunpack.c.l.b16 %v229
        %v319 = vunpack.c.h.b16 %v229
        %v320 = vpack.c.b16 %v268, %v264
        %v321 = vpack.c.b16 %v269, %v265
        %v322 = vpack.c.b16 %v270, %v266
        %v323 = vpack.c.b16 %v271, %v267
        %v324 = vpack.c.b16 %v276, %v272
        %v325 = vpack.c.b16 %v277, %v273
        %v326 = vpack.c.b16 %v278, %v274
        %v327 = vpack.c.b16 %v279, %v275
        %v328 = vpack.c.b16 %v284, %v280
        %v329 = vpack.c.b16 %v285, %v281
        %v330 = vpack.c.b16 %v286, %v282
        %v331 = vpack.c.b16 %v287, %v283
        %v332 = vpack.c.b16 %v292, %v288
        %v333 = vpack.c.b16 %v293, %v289
        %v334 = vpack.c.b16 %v294, %v290
        %v335 = vpack.c.b16 %v295, %v291
        %v336 = vpack.c.b16 %v300, %v296
        %v337 = vpack.c.b16 %v301, %v297
        %v338 = vpack.c.b16 %v302, %v298
        %v339 = vpack.c.b16 %v303, %v299
        %v340 = vpack.c.b16 %v308, %v304
        %v341 = vpack.c.b16 %v309, %v305
        %v342 = vpack.c.b16 %v310, %v306
        %v343 = vpack.c.b16 %v311, %v307
        %v344 = vpack.c.b16 %v316, %v312
        %v345 = vpack.c.b16 %v317, %v313
        %v346 = vpack.c.b16 %v318, %v314
        %v347 = vpack.c.b16 %v319, %v315
        %vm372 = vcmask 883712
        %v374 = vsel %vm372, %v201, 0
        %vm376 = vcmask 1045504
        %v378 = vsel %vm376, %v344, 0
        %v381 = vsel %vm376, %v345, 0
        %v384 = vsel %vm376, %v346, 0
        %v387 = vsel %vm376, %v347, 0
        %389 = vmatprep.subr.bf16.mxu0 %v321
        %390 = vmatpush1.bf16.msra.mxu0 %v320
        %391 = vmatprep.subr.bf16.mxu0 %v325
        %392 = vmatpush1.bf16.msra.mxu0 %v324
        %393 = vmatprep.subr.bf16.mxu0 %v329
        %394 = vmatpush1.bf16.msra.mxu0 %v328
        %395 = vmatprep.subr.bf16.mxu0 %v333
        %396 = vmatpush1.bf16.msra.mxu0 %v332
        %397 = vmatprep.subr.bf16.mxu0 %v337
        %398 = vmatpush1.bf16.msra.mxu0 %v336
        %399 = vmatprep.subr.bf16.mxu0 %v341
        %400 = vmatpush1.bf16.msra.mxu0 %v340
        %401 = vmatprep.subr.bf16.mxu0 %v381
        %402 = vmatpush1.bf16.msra.mxu0 %v378
        %403 = vmatprep.subr.bf16.mxu0 0
        %404 = vmatpush1.bf16.msra.mxu0 0
        %405 = vmatprep.subr.bf16.mxu0 0
        %406 = vmatpush1.bf16.msra.mxu0 0
        %407 = vmatprep.subr.bf16.mxu0 0
        %408 = vmatpush1.bf16.msra.mxu0 0
        %409 = vmatprep.subr.bf16.mxu0 0
        %410 = vmatpush1.bf16.msra.mxu0 0
        %411 = vmatprep.subr.bf16.mxu0 0
        %412 = vmatpush1.bf16.msra.mxu0 0
        %413 = vmatprep.subr.bf16.mxu0 0
        %414 = vmatpush1.bf16.msra.mxu0 0
        %415 = vmatprep.subr.bf16.mxu0 0
        %416 = vmatpush1.bf16.msra.mxu0 0
        %417 = vmatprep.subr.bf16.mxu0 0
        %418 = vmatpush1.bf16.msra.mxu0 0
        %419 = vmatprep.subr.bf16.mxu0 0
        %420 = vmatpush1.bf16.msra.mxu0 0
        %421 = vmatprep.mubr.bf16.mxu0 0
        %422 = vmatmul.mubr.bf16.gmra.mrb[0].mxu0 %v374
        %v423 = vpop.f32.mrb[0].mxu0
        %v424 = vadd.f32 %v234, %v423
        %v425 = vpop.f32.mrb[0].mxu0
        %v426 = vadd.f32 %v234, %v425
        %v427 = vpop.f32.mrb[0].mxu0
        %v428 = vpop.f32.mrb[0].mxu0
        %429 = vdwg.mxu0
        %430 = vmatprep.subr.bf16.mxu0 %v323
        %431 = vmatpush1.bf16.msra.mxu0 %v322
        %432 = vmatprep.subr.bf16.mxu0 %v327
        %433 = vmatpush1.bf16.msra.mxu0 %v326
        %434 = vmatprep.subr.bf16.mxu0 %v331
        %435 = vmatpush1.bf16.msra.mxu0 %v330
        %436 = vmatprep.subr.bf16.mxu0 %v335
        %437 = vmatpush1.bf16.msra.mxu0 %v334
        %438 = vmatprep.subr.bf16.mxu0 %v339
        %439 = vmatpush1.bf16.msra.mxu0 %v338
        %440 = vmatprep.subr.bf16.mxu0 %v343
        %441 = vmatpush1.bf16.msra.mxu0 %v342
        %442 = vmatprep.subr.bf16.mxu0 %v387
        %443 = vmatpush1.bf16.msra.mxu0 %v384
        %444 = vmatprep.subr.bf16.mxu0 0
        %445 = vmatpush1.bf16.msra.mxu0 0
        %446 = vmatprep.subr.bf16.mxu0 0
        %447 = vmatpush1.bf16.msra.mxu0 0
        %448 = vmatprep.subr.bf16.mxu0 0
        %449 = vmatpush1.bf16.msra.mxu0 0
        %450 = vmatprep.subr.bf16.mxu0 0
        %451 = vmatpush1.bf16.msra.mxu0 0
        %452 = vmatprep.subr.bf16.mxu0 0
        %453 = vmatpush1.bf16.msra.mxu0 0
        %454 = vmatprep.subr.bf16.mxu0 0
        %455 = vmatpush1.bf16.msra.mxu0 0
        %456 = vmatprep.subr.bf16.mxu0 0
        %457 = vmatpush1.bf16.msra.mxu0 0
        %458 = vmatprep.subr.bf16.mxu0 0
        %459 = vmatpush1.bf16.msra.mxu0 0
        %460 = vmatprep.subr.bf16.mxu0 0
        %461 = vmatpush1.bf16.msra.mxu0 0
        %462 = vmatprep.mubr.bf16.mxu0 0
        %463 = vmatmul.mubr.bf16.gmra.mrb[0].mxu0 %v374
        %v464 = vpop.f32.mrb[0].mxu0
        %v465 = vadd.f32 %v234, %v464
        %v466 = vpop.f32.mrb[0].mxu0
        %v467 = vadd.f32 %v234, %v466
        %v468 = vpop.f32.mrb[0].mxu0
        %v469 = vpop.f32.mrb[0].mxu0
        %470 = vdwg.mxu0
        %v471 = vmax.f32 %v424, 0.0
        %v472 = vmax.f32 %v426, 0.0
        %v473 = vmax.f32 %v465, 0.0
        %v474 = vmax.f32 %v467, 0.0
        %475 = vst [vmem:[%s188] sm:$0xff] %v471
        %476 = vst [vmem:[%s188 + $0x8] sm:$0xff] %v472
        %477 = vst [vmem:[%s188 + $0x10] sm:$0xff] %v473
        %478 = vst [vmem:[%s188 + $0x18] sm:$0xff] %v474
        %s479 = sand.u32 %s109, 1
        %s480 = scalar_lea.sflag [#allocation3], %s479
        %s481 = sand.u32 %s109, 1
        %s482 = smul.addr %s481, 32
        %s483 = scalar_lea.vmem [#allocation2], %s482
        // Predicated region
        $region33: #{tpu_custom_call.1} parent=31 // pred_check
          %p484 = pneg %p119
        $region34: #{tpu_custom_call.1} parent=31 // pred_check_branch
          %486 = sbr.rel (%p484) target = $region36
        $region35: #{tpu_custom_call.1} parent=31 // pred_region
          %s487 = smul.u32 4, %s22
          %s489 = ssub.s32 512, 512
          %490 = vsyncadd %s480, %s489
          %s491 = smul.addr %s21, 4
          %s492 = sadd.s32 %s487, %s491
          %s493 = smul.addr %s492, 128
          %s494 = scalar_lea.hbm %s3, %s493
          %s496 = sshll.u32 %s483, 4
          %s497 = int_to_ptr.vmem [resolvable:$true] %s496
          %499 = dma.vmem_to_hbm [thread:$0]  %s497, 512, %s494, %s480
        $region36: #{tpu_custom_call.1} parent=31 // pred_fallthru
          _
      $region32: #{tpu_custom_call.1} parent=5 // pred_fallthru
        _
      %p500 = scmp.le.s32.totalorder 2, %s12
      // Predicated region
      $region37: #{tpu_custom_call.1} parent=5 // pred_check
        %p501 = pneg %p500
      $region38: #{tpu_custom_call.1} parent=5 // pred_check_branch
        %503 = sbr.rel (%p501) target = $region40
      $region39: #{tpu_custom_call.1} parent=5 // pred_region
        %s504 = ssub.s32 %s12, 2
        // Predicated region
        $region41: #{tpu_custom_call.1} parent=39 // pred_check
          %p505 = pneg %p125
        $region42: #{tpu_custom_call.1} parent=39 // pred_check_branch
          %507 = sbr.rel (%p505) target = $region44
        $region43: #{tpu_custom_call.1} parent=39 // pred_region
          %s508 = sand.u32 %s110, 1
          %s509 = scalar_lea.sflag [#allocation3], %s508
          %s510 = sand.u32 %s110, 1
          %s511 = smul.addr %s510, 32
          %s512 = scalar_lea.vmem [#allocation2], %s511
          %513 = dma.done %s509, 512
        $region44: #{tpu_custom_call.1} parent=39 // pred_fallthru
          _
      $region40: #{tpu_custom_call.1} parent=5 // pred_fallthru
        _
    $region6: #{tpu_custom_call.1} parent=1 // loop_footer
      %s16 = sadd.s32 1, %s12
    $region7: #{tpu_custom_call.1} parent=1 // loop_footer_branch
      %11 = sbr.rel target = $region3
    $region8: #{tpu_custom_call.1} parent=1 // loop_exit
      _
    %514 = vsyncpa [#allocation3], 1
    %s515 = scalar_lea.sflag [#allocation3], 1
    %516 = vsyncpa %s515, 1

</llo_original>
